<compile_context>
chip_gen: v5e
topology: v5e:2x2
jax: 0.10.0
libtpu: 0.0.40
codegen_flags: <defaults>
</compile_context>

<pallas_src>
import functools

import jax
import jax.numpy as jnp
from jax.experimental import pallas as pl
from jax.experimental.pallas import tpu as pltpu


def _round_up(x, m):
    return ((x + m - 1) // m) * m


def _node_kernel(*refs, n_children, residual, compute_dtype, precision):
    # refs = (x_0 .. x_{n-1}, w_0 .. w_{n-1}, shift, out)
    #   x_c:   (C_c_pad, TM)       child activation tile, spatial on lanes
    #   w_c:   (C_out_pad, C_c_pad) BN-scale-folded weight block (resident,
    #                               already in compute_dtype)
    #   shift: (C_out_pad, 1)      folded BN shift (f32), lane-broadcast
    #   out:   (C_out_pad, TM)
    x_refs = refs[:n_children]
    w_refs = refs[n_children:2 * n_children]
    shift_ref = refs[2 * n_children]
    o_ref = refs[2 * n_children + 1]

    x0 = x_refs[0][...]                     # hoisted: matmul operand + residual
    y = jnp.dot(w_refs[0][...], x0.astype(compute_dtype),
                preferred_element_type=jnp.float32, precision=precision)
    for c in range(1, n_children):
        y = y + jnp.dot(w_refs[c][...], x_refs[c][...].astype(compute_dtype),
                        preferred_element_type=jnp.float32, precision=precision)

    y = y + shift_ref[...]                  # (C_out_pad, 1) -> lane broadcast
    if residual:
        # children[0] tile is already in VMEM; no extra DMA.
        y = y + x0.astype(jnp.float32)
    o_ref[...] = jnp.maximum(y, 0.0).astype(o_ref.dtype)


def dla_node_forward(xs, conv_weight, bn_gamma, bn_beta, bn_mean, bn_var,
                     *, residual=True, eps=1e-5, tm=4096,
                     compute_dtype=jnp.bfloat16, out_dtype=None,
                     vmem_limit_bytes=None):
    """Fused 1x1-conv + BN + ReLU (+residual) over a list of NCHW children.

    xs:          tuple of NCHW arrays (children); channels may differ per child.
    conv_weight: (C_out, sum(C_c), 1, 1) 1x1 conv weight, no bias.
    bn_*:        (C_out,) BatchNorm2d params / running statistics.
    compute_dtype: MXU operand dtype (bf16 default; pass jnp.float32 for exact).
    out_dtype:   output dtype (default: xs[0].dtype; bf16 recommended for
                 inference to halve writeback bytes).
    """
    xs = tuple(xs)
    n_children = len(xs)
    N, _, H, W = xs[0].shape
    child_channels = [int(x.shape[1]) for x in xs]
    C_in = sum(child_channels)
    C_out = int(conv_weight.shape[0])
    assert int(conv_weight.shape[1]) == C_in, "conv weight C_in mismatch"
    if residual:
        assert child_channels[0] == C_out, \
            "residual requires children[0] channels == out_channels"

    act_dtype = xs[0].dtype
    out_dtype = act_dtype if out_dtype is None else out_dtype
    hw = H * W

    # ---- channel padding to sublane multiples (no-op for production DLA sizes)
    CH = 8
    child_cpad = [_round_up(c, CH) for c in child_channels]
    cout_pad = _round_up(C_out, CH)

    # ---- fold BN (inference) into the weight + a per-channel shift.
    scale = (bn_gamma.astype(jnp.float32)
             / jnp.sqrt(bn_var.astype(jnp.float32) + eps))          # (C_out,)
    shift = (bn_beta.astype(jnp.float32)
             - bn_mean.astype(jnp.float32) * scale)                 # (C_out,)
    w2d = conv_weight.reshape(C_out, C_in).astype(jnp.float32) * scale[:, None]
    if cout_pad != C_out:
        w2d = jnp.pad(w2d, ((0, cout_pad - C_out), (0, 0)))
        shift = jnp.pad(shift, (0, cout_pad - C_out))
    shift = shift.reshape(cout_pad, 1)

    # Per-child weight blocks (tiny), zero-padded columns, pre-cast to compute_dtype.
    w_split, off = [], 0
    for c, cp in zip(child_channels, child_cpad):
        wb = w2d[:, off:off + c]
        if cp != c:
            wb = jnp.pad(wb, ((0, 0), (0, cp - c)))
        w_split.append(wb.astype(compute_dtype))
        off += c

    # Children: NCHW -> (N, C_pad, H*W).  The reshape is a free view; the channel
    # pad only materializes for odd channel counts.
    x3d = []
    for x, c, cp in zip(xs, child_channels, child_cpad):
        x = x.reshape(N, c, hw)
        if cp != c:
            x = jnp.pad(x, ((0, 0), (0, cp - c), (0, 0)))
        x3d.append(x)

    # ---- generation-aware lane-tile / VMEM sizing
    try:
        phys_vmem = int(pltpu.get_tpu_info().vmem_capacity_bytes)
    except Exception:
        phys_vmem = 64 * 1024 * 1024        # conservative (v7x per-core)
    budget = min(phys_vmem * 3 // 4, 96 * 1024 * 1024)
    if vmem_limit_bytes is None:
        vmem_limit_bytes = budget
    budget = min(budget, int(vmem_limit_bytes))

    act_esize = jnp.dtype(act_dtype).itemsize
    out_esize = jnp.dtype(out_dtype).itemsize
    w_esize = jnp.dtype(compute_dtype).itemsize
    fixed = 2 * sum(cout_pad * cp for cp in child_cpad) * w_esize   # resident W
    fixed += 2 * cout_pad * 4                                       # shift
    fixed += 2 * 1024 * 1024                                        # slack
    per_lane = 2 * sum(child_cpad) * act_esize + 2 * cout_pad * out_esize
    tm_fit = max(128, (max(budget - fixed, 0) // per_lane) // 128 * 128)
    tm_cap = max(128, min(tm, tm_fit))

    if hw < 128:
        tm_eff = hw                          # single full-extent lane block
    else:
        tm_eff = min(tm_cap, (hw // 128) * 128)
        # Guarantee >=2 grid programs when possible so both v7x TCs get work.
        while N * pl.cdiv(hw, tm_eff) < 2 and tm_eff > 128:
            tm_eff = max(128, (tm_eff // 2) // 128 * 128)
    m_blocks = pl.cdiv(hw, tm_eff)           # partial trailing block masked by Pallas

    prec = (jax.lax.Precision.HIGHEST
            if jnp.dtype(compute_dtype) == jnp.dtype(jnp.float32) else None)
    kernel = functools.partial(_node_kernel, n_children=n_children,
                               residual=residual, compute_dtype=compute_dtype,
                               precision=prec)

    grid = (N, m_blocks)
    in_specs = (
        [pl.BlockSpec((None, cp, tm_eff), lambda n, m: (n, 0, m))
         for cp in child_cpad]                               # child activation tiles
        + [pl.BlockSpec((cout_pad, cp), lambda n, m: (0, 0))
           for cp in child_cpad]                             # resident weight blocks
        + [pl.BlockSpec((cout_pad, 1), lambda n, m: (0, 0))] # resident BN shift
    )
    out_spec = pl.BlockSpec((None, cout_pad, tm_eff), lambda n, m: (n, 0, m))

    out3d = pl.pallas_call(
        kernel,
        out_shape=jax.ShapeDtypeStruct((N, cout_pad, hw), out_dtype),
        grid_spec=pltpu.PrefetchScalarGridSpec(
            num_scalar_prefetch=0,
            grid=grid,
            in_specs=in_specs,
            out_specs=out_spec,
        ),
        compiler_params=pltpu.CompilerParams(
            dimension_semantics=("parallel", "parallel"),
            vmem_limit_bytes=int(vmem_limit_bytes)),
    )(*x3d, *w_split, shift)

    if cout_pad != C_out:
        out3d = out3d[:, :C_out, :]
    return out3d.reshape(N, C_out, H, W)


def _reference(xs, conv_weight, bn_gamma, bn_beta, bn_mean, bn_var,
               residual=True, eps=1e-5):
    xcat = jnp.concatenate(xs, axis=1)
    y = jax.lax.conv_general_dilated(
        xcat, conv_weight, window_strides=(1, 1), padding="VALID",
        dimension_numbers=("NCHW", "OIHW", "NCHW"))
    scale = bn_gamma / jnp.sqrt(bn_var + eps)
    shift = bn_beta - bn_mean * scale
    y = y * scale[None, :, None, None] + shift[None, :, None, None]
    if residual:
        y = y + xs[0]
    return jnp.maximum(y, 0.0)


if __name__ == "__main__":
    key = jax.random.PRNGKey(0)
    k1, k2, k3, k4, k5, k6, k7, k8, k9, k10 = jax.random.split(key, 10)

    # ---- Case 1: aggregation node with residual (matches the DLA node shape).
    N, C1, C2, H, W = 2, 4, 4, 16, 16
    C_in, C_out = C1 + C2, 4

    x1 = jax.random.normal(k1, (N, C1, H, W), dtype=jnp.float32)
    x2 = jax.random.normal(k2, (N, C2, H, W), dtype=jnp.float32)
    conv_weight = jax.random.normal(k3, (C_out, C_in, 1, 1), dtype=jnp.float32) * 0.1
    bn_gamma = 1.0 + 0.1 * jax.random.normal(k4, (C_out,), dtype=jnp.float32)
    bn_beta = 0.1 * jax.random.normal(k5, (C_out,), dtype=jnp.float32)
    bn_mean = 0.1 * jax.random.normal(k6, (C_out,), dtype=jnp.float32)
    bn_var = jnp.abs(jax.random.normal(k7, (C_out,), dtype=jnp.float32)) + 0.5

    ref = _reference((x1, x2), conv_weight, bn_gamma, bn_beta, bn_mean, bn_var,
                     residual=True)

    # Default inference path: bf16 MXU operands + bf16 output, f32 accumulation.
    out_bf16 = dla_node_forward((x1, x2), conv_weight, bn_gamma, bn_beta,
                                bn_mean, bn_var, residual=True,
                                out_dtype=jnp.bfloat16)
    out_bf16 = jax.block_until_ready(out_bf16)
    assert out_bf16.shape == (N, C_out, H, W)
    assert out_bf16.dtype == jnp.bfloat16
    assert jnp.allclose(out_bf16.astype(jnp.float32), ref,
                        atol=2e-2, rtol=2e-2), "bf16 path mismatch"

    # Exactness check with f32 matmul operands and f32 output.
    out_f32 = dla_node_forward((x1, x2), conv_weight, bn_gamma, bn_beta,
                               bn_mean, bn_var, residual=True,
                               compute_dtype=jnp.float32)
    out_f32 = jax.block_until_ready(out_f32)
    assert out_f32.dtype == jnp.float32
    assert jnp.allclose(out_f32, ref, atol=1e-3, rtol=1e-3), "f32 path mismatch"

    # ---- Case 2: no residual, odd channel counts, non-128-divisible spatial
    # (exercises channel padding + the masked partial lane block).
    N2, Ca, Cb, H2, W2, Co2 = 2, 6, 4, 10, 10, 5
    xa = jax.random.normal(k8, (N2, Ca, H2, W2), dtype=jnp.float32)
    xb = jax.random.normal(k9, (N2, Cb, H2, W2), dtype=jnp.float32)
    w2 = jax.random.normal(k10, (Co2, Ca + Cb, 1, 1), dtype=jnp.float32) * 0.1
    g2 = jnp.ones((Co2,), jnp.float32)
    b2 = jnp.zeros((Co2,), jnp.float32)
    m2 = jnp.zeros((Co2,), jnp.float32)
    v2 = jnp.ones((Co2,), jnp.float32)

    ref2 = _reference((xa, xb), w2, g2, b2, m2, v2, residual=False)
    out2 = dla_node_forward((xa, xb), w2, g2, b2, m2, v2, residual=False,
                            compute_dtype=jnp.float32)
    out2 = jax.block_until_ready(out2)
    assert out2.shape == (N2, Co2, H2, W2)
    assert jnp.allclose(out2, ref2, atol=1e-3, rtol=1e-3), "padded path mismatch"

    print("KERNEL_OK")
</pallas_src>

<mosaic_0001>
module attributes {stable_mosaic.version = 11 : i64} {
  func.func @_node_kernel(%arg0: i32, %arg1: i32, %arg2: memref<1x8x256xf32, #tpu.memory_space<vmem>>, %arg3: memref<1x8x256xf32, #tpu.memory_space<vmem>>, %arg4: memref<8x8xbf16, #tpu.memory_space<vmem>>, %arg5: memref<8x8xbf16, #tpu.memory_space<vmem>>, %arg6: memref<8x1xf32, #tpu.memory_space<vmem>>, %arg7: memref<1x8x256xbf16, #tpu.memory_space<vmem>>) attributes {dimension_semantics = [#tpu.dimension_semantics<parallel>, #tpu.dimension_semantics<parallel>], iteration_bounds = array<i64: 2, 1>, scalar_prefetch = 0 : i64, scratch_operands = 0 : i64, tpu.core_type = #tpu.core_type<tc>, window_params = [{transform_indices = @transform_0, window_bounds = array<i64: 1, 8, 256>}, {transform_indices = @transform_1, window_bounds = array<i64: 1, 8, 256>}, {pipeline_mode = #tpu.pipeline_mode<synchronous>, transform_indices = @transform_2, window_bounds = array<i64: 8, 8>}, {pipeline_mode = #tpu.pipeline_mode<synchronous>, transform_indices = @transform_3, window_bounds = array<i64: 8, 8>}, {pipeline_mode = #tpu.pipeline_mode<synchronous>, transform_indices = @transform_4, window_bounds = array<i64: 8, 1>}, {transform_indices = @transform_5, window_bounds = array<i64: 1, 8, 256>}]} {
    %c0 = arith.constant 0 : index
    %c0_0 = arith.constant 0 : index
    %c0_1 = arith.constant 0 : index
    %0 = vector.load %arg2[%c0, %c0_0, %c0_1] : memref<1x8x256xf32, #tpu.memory_space<vmem>>, vector<1x8x256xf32>
    %1 = vector.shape_cast %0 : vector<1x8x256xf32> to vector<8x256xf32>
    %c0_2 = arith.constant 0 : index
    %c0_3 = arith.constant 0 : index
    %2 = vector.load %arg4[%c0_2, %c0_3] : memref<8x8xbf16, #tpu.memory_space<vmem>>, vector<8x8xbf16>
    %3 = arith.truncf %1 : vector<8x256xf32> to vector<8x256xbf16>
    %cst = arith.constant dense<0.000000e+00> : vector<8x256xf32>
    %4 = tpu.matmul %2, %3, %cst {dimension_numbers = #tpu.dot_dimension_numbers<[1], [0], [0], [1], [0, 0, 1, 1], [], []>} : vector<8x8xbf16>, vector<8x256xbf16>, vector<8x256xf32> -> vector<8x256xf32>
    %c0_4 = arith.constant 0 : index
    %c0_5 = arith.constant 0 : index
    %5 = vector.load %arg5[%c0_4, %c0_5] : memref<8x8xbf16, #tpu.memory_space<vmem>>, vector<8x8xbf16>
    %c0_6 = arith.constant 0 : index
    %c0_7 = arith.constant 0 : index
    %c0_8 = arith.constant 0 : index
    %6 = vector.load %arg3[%c0_6, %c0_7, %c0_8] : memref<1x8x256xf32, #tpu.memory_space<vmem>>, vector<1x8x256xf32>
    %7 = vector.shape_cast %6 : vector<1x8x256xf32> to vector<8x256xf32>
    %8 = arith.truncf %7 : vector<8x256xf32> to vector<8x256xbf16>
    %cst_9 = arith.constant dense<0.000000e+00> : vector<8x256xf32>
    %9 = tpu.matmul %5, %8, %cst_9 {dimension_numbers = #tpu.dot_dimension_numbers<[1], [0], [0], [1], [0, 0, 1, 1], [], []>} : vector<8x8xbf16>, vector<8x256xbf16>, vector<8x256xf32> -> vector<8x256xf32>
    %10 = arith.addf %4, %9 : vector<8x256xf32>
    %c0_10 = arith.constant 0 : index
    %c0_11 = arith.constant 0 : index
    %11 = vector.load %arg6[%c0_10, %c0_11] : memref<8x1xf32, #tpu.memory_space<vmem>>, vector<8x1xf32>
    %12 = vector.broadcast %11 : vector<8x1xf32> to vector<8x256xf32>
    %13 = arith.addf %10, %12 : vector<8x256xf32>
    %14 = arith.addf %13, %1 : vector<8x256xf32>
    %cst_12 = arith.constant 0.000000e+00 : f32
    %15 = vector.broadcast %cst_12 : f32 to vector<8x256xf32>
    %16 = arith.maximumf %14, %15 : vector<8x256xf32>
    %17 = arith.truncf %16 : vector<8x256xf32> to vector<8x256xbf16>
    %c0_13 = arith.constant 0 : index
    %c0_14 = arith.constant 0 : index
    %c0_15 = arith.constant 0 : index
    %18 = vector.load %arg7[%c0_13, %c0_14, %c0_15] : memref<1x8x256xbf16, #tpu.memory_space<vmem>>, vector<1x8x256xbf16>
    %19 = vector.shape_cast %18 : vector<1x8x256xbf16> to vector<8x256xbf16>
    %20 = vector.shape_cast %17 : vector<8x256xbf16> to vector<1x8x256xbf16>
    tpu.vector_store %arg7[%c0_13, %c0_14, %c0_15], %20 {strides = array<i32>} : memref<1x8x256xbf16, #tpu.memory_space<vmem>>, vector<1x8x256xbf16>,
    return
  }
  func.func @transform_0(%arg0: i32, %arg1: i32) -> (i32, i32, i32) {
    %c0_i32 = arith.constant 0 : i32
    %c0_i32_0 = arith.constant 0 : i32
    return %arg0, %c0_i32, %arg1 : i32, i32, i32
  }
  func.func @transform_1(%arg0: i32, %arg1: i32) -> (i32, i32, i32) {
    %c0_i32 = arith.constant 0 : i32
    %c0_i32_0 = arith.constant 0 : i32
    return %arg0, %c0_i32, %arg1 : i32, i32, i32
  }
  func.func @transform_2(%arg0: i32, %arg1: i32) -> (i32, i32) {
    %c0_i32 = arith.constant 0 : i32
    %c0_i32_0 = arith.constant 0 : i32
    %c0_i32_1 = arith.constant 0 : i32
    return %c0_i32, %c0_i32_0 : i32, i32
  }
  func.func @transform_3(%arg0: i32, %arg1: i32) -> (i32, i32) {
    %c0_i32 = arith.constant 0 : i32
    %c0_i32_0 = arith.constant 0 : i32
    %c0_i32_1 = arith.constant 0 : i32
    return %c0_i32, %c0_i32_0 : i32, i32
  }
  func.func @transform_4(%arg0: i32, %arg1: i32) -> (i32, i32) {
    %c0_i32 = arith.constant 0 : i32
    %c0_i32_0 = arith.constant 0 : i32
    %c0_i32_1 = arith.constant 0 : i32
    return %c0_i32, %c0_i32_0 : i32, i32
  }
  func.func @transform_5(%arg0: i32, %arg1: i32) -> (i32, i32, i32) {
    %c0_i32 = arith.constant 0 : i32
    %c0_i32_0 = arith.constant 0 : i32
    return %arg0, %c0_i32, %arg1 : i32, i32, i32
  }
}

</mosaic_0001>

<llo_original>
// kernel: tpu_custom_call.1
$region0: #{tpu_custom_call.1}
  #allocation0 [shape = 'u32[]', space=smem, size = 0x4, offset = 0x4, fixed_abs, tag = 'smem constant byte address 0x4 - core index']
  #allocation1 [shape = 'u32[72,128]{1,0:T(1,128)}', space=vmem, size = 0x9000, scoped, tag = 'internal scratch']
  %s0 = inlined_call_operand.hbm [shape: f32[2,8,256], index: 0, kind: input, shape index: {}]
  %s1 = inlined_call_operand.hbm [shape: f32[2,8,256], index: 1, kind: input, shape index: {}]
  %s2 = inlined_call_operand.vmem [shape: bf16[8,8], index: 2, kind: input, shape index: {}]
  %s3 = inlined_call_operand.vmem [shape: bf16[8,8], index: 3, kind: input, shape index: {}]
  %s4 = inlined_call_operand.vmem [shape: f32[8,1], index: 4, kind: input, shape index: {}]
  %s5 = inlined_call_operand.hbm [shape: bf16[2,8,256], index: 5, kind: output, shape index: {}]
  %s6 = sld [smem:[#allocation0]]
  $region61: #{tpu_custom_call.1} parent=0
    _
  %s8 = ssub.s32 1, %s6
  %s9 = scalar_select 0, %s8, %s6
  $region1: #{tpu_custom_call.1} parent=0
    #allocation2 [shape = 'u8[16384]{0}', space=vmem, size = 0x4000, scoped, tag = 'input window, operand 0']
    #allocation3 [shape = 's32[2]{0}', space=sflag, size = 0x8, scoped, tag = 'scoped memory for tpu_custom_call.1']
    #allocation4 [shape = 's32[2]{0}', space=sflag, size = 0x8, scoped, tag = 'scoped memory for tpu_custom_call.1']
    #allocation5 [shape = 'u8[16384]{0}', space=vmem, size = 0x4000, scoped, tag = 'input window, operand 1']
    #allocation6 [shape = 's32[2]{0}', space=sflag, size = 0x8, scoped, tag = 'scoped memory for tpu_custom_call.1']
    #allocation7 [shape = 'u8[8192]{0}', space=vmem, size = 0x2000, scoped, tag = 'output window, operand 0']
    %10 = vsyncpa [#allocation3], 0
    %s11 = scalar_lea.sflag [#allocation3], 1
    %12 = vsyncpa %s11, 0
    %13 = vsyncpa [#allocation6], 0
    %s14 = scalar_lea.sflag [#allocation6], 1
    %15 = vsyncpa %s14, 0
    %16 = vsyncpa [#allocation4], 0
    %s17 = scalar_lea.sflag [#allocation4], 1
    %18 = vsyncpa %s17, 0
    loop: start=0, step=1, limit=4
    $region2: #{tpu_custom_call.1} parent=1 // loop_pre_header
      _
    $region3: #{tpu_custom_call.1} parent=1 // loop_header
      %s20 = sphi 0, %s24
      %p21 = scmp.ge.s32.totalorder %s20, 4
      %s27 = sphi 0, %s39
      %s28 = sphi 0, %s35
      %s29 = sphi 0, %s27
      %s30 = sphi 0, %s28
      %s31 = sphi 0, %s29
      %s32 = sphi 0, %s30
      %s44 = sphi 0, %s46
      %s47 = sphi 0, %s44
      %s48 = sphi 0, %s47
      %s64 = sphi 0, %s48
      %s72 = sphi 0, %s74
      %s75 = sphi 0, %s72
      %s76 = sphi 0, %s75
      %s92 = sphi 0, %s76
      %s96 = sphi 0, %s96
      %s98 = sphi 0, %s96
      %s99 = sphi 0, %s98
      %s113 = sphi 0, %s99
      %s117 = sphi 0, %s117
      %s119 = sphi 0, %s117
      %s120 = sphi 0, %s119
      %s134 = sphi 0, %s120
      %s138 = sphi 0, %s138
      %s140 = sphi 0, %s138
      %s141 = sphi 0, %s140
      %s155 = sphi 0, %s141
      %s163 = sphi 0, %s165
      %s166 = sphi 0, %s163
      %s167 = sphi 0, %s166
      %s183 = sphi 0, %s167
    $region4: #{tpu_custom_call.1} parent=1 // loop_header_branch
      %23 = sbr.rel (%p21) target = $region8
    $region5: #{tpu_custom_call.1} parent=1 // loop_body
      %s25 = ssub.s32 %s20, 1
      %s26 = ssub.s32 %s20, 2
      %s33 = sadd.s32 1, %s28
      %p34 = scmp.ge.s32.totalorder %s33, 1
      %s35 = scalar_select %p34, 0, %s33
      %s36 = sadd.s32 1, %s27
      %s37 = scalar_select %p34, %s36, %s27
      %p38 = scmp.ge.s32.totalorder %s37, 2
      %s39 = scalar_select %p38, 0, %s37
      %s40 = ssub.s32 %s27, %s39
      %s41 = ssub.s32 %s28, %s35
      %s42 = sor.u32 %s40, %s41
      %p43 = scmp.eq.s32.totalorder %s42, 0
      %s45 = sadd.s32 %s44, 1
      %s46 = scalar_select %p43, %s44, %s45
      %p49 = pneg %p43
      %p50 = scmp.eq.s32.totalorder %s20, 1
      %p51 = por %p49, %p50
      %p52 = scmp.ne.s32.totalorder %s44, %s47
      %p53 = scmp.eq.s32.totalorder %s20, 0
      %p54 = por %p52, %p53
      %p55 = scmp.ne.s32.totalorder %s44, %s47
      %p56 = scmp.eq.s32.totalorder %s25, 1
      %p57 = por %p55, %p56
      %p58 = scmp.ne.s32.totalorder %s47, %s48
      %p59 = scmp.eq.s32.totalorder %s25, 0
      %p60 = por %p58, %p59
      %p61 = scmp.ne.s32.totalorder %s47, %s48
      %p62 = scmp.eq.s32.totalorder %s26, 1
      %p63 = por %p61, %p62
      %p65 = scmp.ne.s32.totalorder %s48, %s64
      %p66 = scmp.eq.s32.totalorder %s26, 0
      %p67 = por %p65, %p66
      %s68 = ssub.s32 %s27, %s39
      %s69 = ssub.s32 %s28, %s35
      %s70 = sor.u32 %s68, %s69
      %p71 = scmp.eq.s32.totalorder %s70, 0
      %s73 = sadd.s32 %s72, 1
      %s74 = scalar_select %p71, %s72, %s73
      %p77 = pneg %p71
      %p78 = scmp.eq.s32.totalorder %s20, 1
      %p79 = por %p77, %p78
      %p80 = scmp.ne.s32.totalorder %s72, %s75
      %p81 = scmp.eq.s32.totalorder %s20, 0
      %p82 = por %p80, %p81
      %p83 = scmp.ne.s32.totalorder %s72, %s75
      %p84 = scmp.eq.s32.totalorder %s25, 1
      %p85 = por %p83, %p84
      %p86 = scmp.ne.s32.totalorder %s75, %s76
      %p87 = scmp.eq.s32.totalorder %s25, 0
      %p88 = por %p86, %p87
      %p89 = scmp.ne.s32.totalorder %s75, %s76
      %p90 = scmp.eq.s32.totalorder %s26, 1
      %p91 = por %p89, %p90
      %p93 = scmp.ne.s32.totalorder %s76, %s92
      %p94 = scmp.eq.s32.totalorder %s26, 0
      %p95 = por %p93, %p94
      %s97 = sadd.s32 %s96, 1
      %p100 = scmp.eq.s32.totalorder %s20, 1
      %p101 = scmp.ne.s32.totalorder %s96, %s98
      %p102 = scmp.eq.s32.totalorder %s20, 0
      %p103 = por %p101, %p102
      %p104 = scmp.ne.s32.totalorder %s96, %s98
      %p105 = scmp.eq.s32.totalorder %s25, 1
      %p106 = por %p104, %p105
      %p107 = scmp.ne.s32.totalorder %s98, %s99
      %p108 = scmp.eq.s32.totalorder %s25, 0
      %p109 = por %p107, %p108
      %p110 = scmp.ne.s32.totalorder %s98, %s99
      %p111 = scmp.eq.s32.totalorder %s26, 1
      %p112 = por %p110, %p111
      %p114 = scmp.ne.s32.totalorder %s99, %s113
      %p115 = scmp.eq.s32.totalorder %s26, 0
      %p116 = por %p114, %p115
      %s118 = sadd.s32 %s117, 1
      %p121 = scmp.eq.s32.totalorder %s20, 1
      %p122 = scmp.ne.s32.totalorder %s117, %s119
      %p123 = scmp.eq.s32.totalorder %s20, 0
      %p124 = por %p122, %p123
      %p125 = scmp.ne.s32.totalorder %s117, %s119
      %p126 = scmp.eq.s32.totalorder %s25, 1
      %p127 = por %p125, %p126
      %p128 = scmp.ne.s32.totalorder %s119, %s120
      %p129 = scmp.eq.s32.totalorder %s25, 0
      %p130 = por %p128, %p129
      %p131 = scmp.ne.s32.totalorder %s119, %s120
      %p132 = scmp.eq.s32.totalorder %s26, 1
      %p133 = por %p131, %p132
      %p135 = scmp.ne.s32.totalorder %s120, %s134
      %p136 = scmp.eq.s32.totalorder %s26, 0
      %p137 = por %p135, %p136
      %s139 = sadd.s32 %s138, 1
      %p142 = scmp.eq.s32.totalorder %s20, 1
      %p143 = scmp.ne.s32.totalorder %s138, %s140
      %p144 = scmp.eq.s32.totalorder %s20, 0
      %p145 = por %p143, %p144
      %p146 = scmp.ne.s32.totalorder %s138, %s140
      %p147 = scmp.eq.s32.totalorder %s25, 1
      %p148 = por %p146, %p147
      %p149 = scmp.ne.s32.totalorder %s140, %s141
      %p150 = scmp.eq.s32.totalorder %s25, 0
      %p151 = por %p149, %p150
      %p152 = scmp.ne.s32.totalorder %s140, %s141
      %p153 = scmp.eq.s32.totalorder %s26, 1
      %p154 = por %p152, %p153
      %p156 = scmp.ne.s32.totalorder %s141, %s155
      %p157 = scmp.eq.s32.totalorder %s26, 0
      %p158 = por %p156, %p157
      %s159 = ssub.s32 %s27, %s39
      %s160 = ssub.s32 %s28, %s35
      %s161 = sor.u32 %s159, %s160
      %p162 = scmp.eq.s32.totalorder %s161, 0
      %s164 = sadd.s32 %s163, 1
      %s165 = scalar_select %p162, %s163, %s164
      %p168 = pneg %p162
      %p169 = scmp.eq.s32.totalorder %s20, 1
      %p170 = por %p168, %p169
      %p171 = scmp.ne.s32.totalorder %s163, %s166
      %p172 = scmp.eq.s32.totalorder %s20, 0
      %p173 = por %p171, %p172
      %p174 = scmp.ne.s32.totalorder %s163, %s166
      %p175 = scmp.eq.s32.totalorder %s25, 1
      %p176 = por %p174, %p175
      %p177 = scmp.ne.s32.totalorder %s166, %s167
      %p178 = scmp.eq.s32.totalorder %s25, 0
      %p179 = por %p177, %p178
      %p180 = scmp.ne.s32.totalorder %s166, %s167
      %p181 = scmp.eq.s32.totalorder %s26, 1
      %p182 = por %p180, %p181
      %p184 = scmp.ne.s32.totalorder %s167, %s183
      %p185 = scmp.eq.s32.totalorder %s26, 0
      %p186 = por %p184, %p185
      %p187 = scmp.le.s32.totalorder 1, %s20
      %p188 = scmp.lt.s32.totalorder %s20, 3
      %p189 = pnand %p187, %p188
      %p190 = pneg %p189
      // Predicated region
      $region9: #{tpu_custom_call.1} parent=5 // pred_check
        _
      $region10: #{tpu_custom_call.1} parent=5 // pred_check_branch
        %192 = sbr.rel (%p189) target = $region12
      $region11: #{tpu_custom_call.1} parent=5 // pred_region
        %s193 = ssub.s32 %s20, 1
        // Predicated region
        $region13: #{tpu_custom_call.1} parent=11 // pred_check
          %p194 = pneg %p109
        $region14: #{tpu_custom_call.1} parent=11 // pred_check_branch
          %196 = sbr.rel (%p194) target = $region16
        $region15: #{tpu_custom_call.1} parent=11 // pred_region
          _
        $region16: #{tpu_custom_call.1} parent=11 // pred_fallthru
          _
        // Predicated region
        $region17: #{tpu_custom_call.1} parent=11 // pred_check
          %p197 = pneg %p130
        $region18: #{tpu_custom_call.1} parent=11 // pred_check_branch
          %199 = sbr.rel (%p197) target = $region20
        $region19: #{tpu_custom_call.1} parent=11 // pred_region
          _
        $region20: #{tpu_custom_call.1} parent=11 // pred_fallthru
          _
        // Predicated region
        $region21: #{tpu_custom_call.1} parent=11 // pred_check
          %p200 = pneg %p151
        $region22: #{tpu_custom_call.1} parent=11 // pred_check_branch
          %202 = sbr.rel (%p200) target = $region24
        $region23: #{tpu_custom_call.1} parent=11 // pred_region
          _
        $region24: #{tpu_custom_call.1} parent=11 // pred_fallthru
          _
      $region12: #{tpu_custom_call.1} parent=5 // pred_fallthru
        _
      %p203 = scmp.lt.s32.totalorder %s20, 2
      // Predicated region
      $region25: #{tpu_custom_call.1} parent=5 // pred_check
        %p204 = pneg %p203
      $region26: #{tpu_custom_call.1} parent=5 // pred_check_branch
        %206 = sbr.rel (%p204) target = $region28
      $region27: #{tpu_custom_call.1} parent=5 // pred_region
        // Predicated region
        $region29: #{tpu_custom_call.1} parent=27 // pred_check
          %p207 = pneg %p54
        $region30: #{tpu_custom_call.1} parent=27 // pred_check_branch
          %209 = sbr.rel (%p207) target = $region32
        $region31: #{tpu_custom_call.1} parent=27 // pred_region
          %s210 = sand.u32 %s44, 1
          %s211 = scalar_lea.sflag [#allocation3], %s210
          %s212 = sand.u32 %s44, 1
          %s213 = smul.addr %s212, 16
          %s214 = scalar_lea.vmem [#allocation2], %s213
          %s215 = smul.u32 2, %s28
          %217 = vsyncadd %s211, 0
          %s218 = smul.addr %s27, 2
          %s219 = sadd.s32 %s215, %s218
          %s220 = smul.addr %s219, 8
          %s221 = scalar_lea.hbm %s0, %s220
          %s223 = sshll.u32 %s221, 4
          %s224 = int_to_ptr.hbm [resolvable:$true] %s223
          %s225 = sshll.u32 %s214, 4
          %s226 = int_to_ptr.vmem [resolvable:$true] %s225
          %228 = dma.hbm_to_vmem [thread:$0]  %s224, 256, %s226, %s211
        $region32: #{tpu_custom_call.1} parent=27 // pred_fallthru
          _
        // Predicated region
        $region33: #{tpu_custom_call.1} parent=27 // pred_check
          %p229 = pneg %p82
        $region34: #{tpu_custom_call.1} parent=27 // pred_check_branch
          %231 = sbr.rel (%p229) target = $region36
        $region35: #{tpu_custom_call.1} parent=27 // pred_region
          %s232 = sand.u32 %s72, 1
          %s233 = scalar_lea.sflag [#allocation6], %s232
          %s234 = sand.u32 %s72, 1
          %s235 = smul.addr %s234, 16
          %s236 = scalar_lea.vmem [#allocation5], %s235
          %s237 = smul.u32 2, %s28
          %239 = vsyncadd %s233, 0
          %s240 = smul.addr %s27, 2
          %s241 = sadd.s32 %s237, %s240
          %s242 = smul.addr %s241, 8
          %s243 = scalar_lea.hbm %s1, %s242
          %s245 = sshll.u32 %s243, 4
          %s246 = int_to_ptr.hbm [resolvable:$true] %s245
          %s247 = sshll.u32 %s236, 4
          %s248 = int_to_ptr.vmem [resolvable:$true] %s247
          %250 = dma.hbm_to_vmem [thread:$0]  %s246, 256, %s248, %s233
        $region36: #{tpu_custom_call.1} parent=27 // pred_fallthru
          _
      $region28: #{tpu_custom_call.1} parent=5 // pred_fallthru
        _
      %p251 = scmp.le.s32.totalorder 1, %s20
      %p252 = scmp.lt.s32.totalorder %s20, 3
      %p253 = pnand %p251, %p252
      %p254 = pneg %p253
      // Predicated region
      $region37: #{tpu_custom_call.1} parent=5 // pred_check
        _
      $region38: #{tpu_custom_call.1} parent=5 // pred_check_branch
        %256 = sbr.rel (%p253) target = $region40
      $region39: #{tpu_custom_call.1} parent=5 // pred_region
        %s257 = ssub.s32 %s20, 1
        %s258 = sand.u32 %s47, 1
        %s259 = scalar_lea.sflag [#allocation3], %s258
        %s260 = sand.u32 %s47, 1
        %s261 = smul.addr %s260, 16
        %s262 = scalar_lea.vmem [#allocation2], %s261
        // Predicated region
        $region41: #{tpu_custom_call.1} parent=39 // pred_check
          %p263 = pneg %p60
        $region42: #{tpu_custom_call.1} parent=39 // pred_check_branch
          %265 = sbr.rel (%p263) target = $region44
        $region43: #{tpu_custom_call.1} parent=39 // pred_region
          %267 = dma.done %s259, 256
        $region44: #{tpu_custom_call.1} parent=39 // pred_fallthru
          _
        %s268 = sand.u32 %s75, 1
        %s269 = scalar_lea.sflag [#allocation6], %s268
        %s270 = sand.u32 %s75, 1
        %s271 = smul.addr %s270, 16
        %s272 = scalar_lea.vmem [#allocation5], %s271
        // Predicated region
        $region45: #{tpu_custom_call.1} parent=39 // pred_check
          %p273 = pneg %p88
        $region46: #{tpu_custom_call.1} parent=39 // pred_check_branch
          %275 = sbr.rel (%p273) target = $region48
        $region47: #{tpu_custom_call.1} parent=39 // pred_region
          %277 = dma.done %s269, 256
        $region48: #{tpu_custom_call.1} parent=39 // pred_fallthru
          _
        %s278 = sand.u32 %s47, 1
        %s279 = scalar_lea.sflag [#allocation3], %s278
        %s280 = sand.u32 %s47, 1
        %s281 = smul.addr %s280, 16
        %s282 = scalar_lea.vmem [#allocation2], %s281
        %p283 = pneg %p60
        %p284 = pneg %p57
        %s285 = sand.u32 %s75, 1
        %s286 = scalar_lea.sflag [#allocation6], %s285
        %s287 = sand.u32 %s75, 1
        %s288 = smul.addr %s287, 16
        %s289 = scalar_lea.vmem [#allocation5], %s288
        %p290 = pneg %p88
        %p291 = pneg %p85
        %p292 = pneg %p109
        %p293 = pneg %p106
        %p294 = pneg %p130
        %p295 = pneg %p127
        %p296 = pneg %p151
        %p297 = pneg %p148
        %p298 = pneg %p179
        %p299 = pneg %p176
        %s300 = sand.u32 %s166, 1
        %s301 = scalar_lea.sflag [#allocation4], %s300
        %s302 = sand.u32 %s166, 1
        %s303 = smul.addr %s302, 8
        %s304 = scalar_lea.vmem [#allocation7], %s303
        %s305 = smul.u32 2, %s30
        %s306 = smul.u32 2, %s30
        %s307 = smul.u32 2, %s30
        %v309 = vld [vmem:[%s262] sm:$0xff]
        %v310 = vld [vmem:[%s262 + $0x8] sm:$0xff]
        %v311 = vld [vmem:[%s2] sm:$0xf]
        %v312 = vpack.c.bf16 %v309, %v309
        %v313 = vpack.c.bf16 %v310, %v310
        %v314 = vld [vmem:[%s3] sm:$0xf]
        %v315 = vld [vmem:[%s272] sm:$0xff]
        %v316 = vld [vmem:[%s272 + $0x8] sm:$0xff]
        %v317 = vpack.c.bf16 %v315, %v315
        %v318 = vpack.c.bf16 %v316, %v316
        %vm319 = vcmask 64512
        %v321 = vsel %vm319, %v314, 0
        %vm323 = vcmask 1043456
        %v325 = vsel %vm323, %v317, 0
        %v328 = vsel %vm323, %v318, 0
        %330 = vmatpush.bf16.msra.mxu0 0
        %331 = vmatpush.bf16.msra.mxu0 0
        %332 = vmatpush.bf16.msra.mxu0 0
        %333 = vmatpush.bf16.msra.mxu0 0
        %334 = vmatpush.bf16.msra.mxu0 0
        %335 = vmatpush.bf16.msra.mxu0 0
        %336 = vmatpush.bf16.msra.mxu0 0
        %337 = vmatpush.bf16.msra.mxu0 %v325
        %338 = vmatmul.bf16.gmra.mxu0 %v321
        %v339 = vpop.f32.mrf.mxu0
        %v340 = vadd.f32 0.0, %v339
        %v341 = vpop.f32.mrf.mxu0
        %342 = vdwg.mxu0
        %343 = vmatpush.bf16.msra.mxu0 0
        %344 = vmatpush.bf16.msra.mxu0 0
        %345 = vmatpush.bf16.msra.mxu0 0
        %346 = vmatpush.bf16.msra.mxu0 0
        %347 = vmatpush.bf16.msra.mxu0 0
        %348 = vmatpush.bf16.msra.mxu0 0
        %349 = vmatpush.bf16.msra.mxu0 0
        %350 = vmatpush.bf16.msra.mxu0 %v328
        %351 = vmatmul.bf16.gmra.mxu0 %v321
        %v352 = vpop.f32.mrf.mxu0
        %v353 = vadd.f32 0.0, %v352
        %v354 = vpop.f32.mrf.mxu0
        %355 = vdwg.mxu0
        %v357 = vsel %vm319, %v311, 0
        %v360 = vsel %vm323, %v312, 0
        %v363 = vsel %vm323, %v313, 0
        %365 = vmatpush.bf16.msra.mxu0 0
        %366 = vmatpush.bf16.msra.mxu0 0
        %367 = vmatpush.bf16.msra.mxu0 0
        %368 = vmatpush.bf16.msra.mxu0 0
        %369 = vmatpush.bf16.msra.mxu0 0
        %370 = vmatpush.bf16.msra.mxu0 0
        %371 = vmatpush.bf16.msra.mxu0 0
        %372 = vmatpush.bf16.msra.mxu0 %v360
        %373 = vmatmul.bf16.gmra.mxu0 %v357
        %v374 = vpop.f32.mrf.mxu0
        %v375 = vadd.f32 %v340, %v374
        %v376 = vpop.f32.mrf.mxu0
        %377 = vdwg.mxu0
        %378 = vmatpush.bf16.msra.mxu0 0
        %379 = vmatpush.bf16.msra.mxu0 0
        %380 = vmatpush.bf16.msra.mxu0 0
        %381 = vmatpush.bf16.msra.mxu0 0
        %382 = vmatpush.bf16.msra.mxu0 0
        %383 = vmatpush.bf16.msra.mxu0 0
        %384 = vmatpush.bf16.msra.mxu0 0
        %385 = vmatpush.bf16.msra.mxu0 %v363
        %386 = vmatmul.bf16.gmra.mxu0 %v357
        %v387 = vpop.f32.mrf.mxu0
        %v388 = vadd.f32 %v353, %v387
        %v389 = vpop.f32.mrf.mxu0
        %390 = vdwg.mxu0
        %v391 = vld [vmem:[%s4] sm:$0xff]
        %393 = vset.pattern.permute.xlu0 0
        %394 = vperm.xlu0 %393, %v391
        %v395 = vpop.permute.xlu0 %394
        %v397 = vadd.f32 %v375, %v395
        %v398 = vadd.f32 %v388, %v395
        %v399 = vadd.f32 %v397, %v309
        %v400 = vadd.f32 %v398, %v310
        %v401 = vmax.f32 %v399, 0.0
        %v402 = vmax.f32 %v400, 0.0
        %v403 = vpack.c.bf16 %v402, %v401
        %404 = vst [vmem:[%s304] sm:$0xff] %v403
        %s405 = sand.u32 %s166, 1
        %s406 = scalar_lea.sflag [#allocation4], %s405
        %s407 = sand.u32 %s166, 1
        %s408 = smul.addr %s407, 8
        %s409 = scalar_lea.vmem [#allocation7], %s408
        // Predicated region
        $region49: #{tpu_custom_call.1} parent=39 // pred_check
          %p410 = pneg %p176
        $region50: #{tpu_custom_call.1} parent=39 // pred_check_branch
          %412 = sbr.rel (%p410) target = $region52
        $region51: #{tpu_custom_call.1} parent=39 // pred_region
          %s413 = smul.u32 2, %s30
          %415 = vsyncadd %s406, 0
          %s416 = smul.addr %s29, 2
          %s417 = sadd.s32 %s413, %s416
          %s418 = smul.addr %s417, 4
          %s419 = scalar_lea.hbm %s5, %s418
          %s421 = sshll.u32 %s409, 4
          %s422 = int_to_ptr.vmem [resolvable:$true] %s421
          %s423 = sshll.u32 %s419, 4
          %s424 = int_to_ptr.hbm [resolvable:$true] %s423
          %426 = dma.vmem_to_hbm [thread:$0]  %s422, 128, %s424, %s406
        $region52: #{tpu_custom_call.1} parent=39 // pred_fallthru
          _
      $region40: #{tpu_custom_call.1} parent=5 // pred_fallthru
        _
      %p427 = scmp.le.s32.totalorder 2, %s20
      // Predicated region
      $region53: #{tpu_custom_call.1} parent=5 // pred_check
        %p428 = pneg %p427
      $region54: #{tpu_custom_call.1} parent=5 // pred_check_branch
        %430 = sbr.rel (%p428) target = $region56
      $region55: #{tpu_custom_call.1} parent=5 // pred_region
        %s431 = ssub.s32 %s20, 2
        // Predicated region
        $region57: #{tpu_custom_call.1} parent=55 // pred_check
          %p432 = pneg %p182
        $region58: #{tpu_custom_call.1} parent=55 // pred_check_branch
          %434 = sbr.rel (%p432) target = $region60
        $region59: #{tpu_custom_call.1} parent=55 // pred_region
          %s435 = sand.u32 %s167, 1
          %s436 = scalar_lea.sflag [#allocation4], %s435
          %s437 = sand.u32 %s167, 1
          %s438 = smul.addr %s437, 8
          %s439 = scalar_lea.vmem [#allocation7], %s438
          %441 = dma.done %s436, 128
        $region60: #{tpu_custom_call.1} parent=55 // pred_fallthru
          _
      $region56: #{tpu_custom_call.1} parent=5 // pred_fallthru
        _
    $region6: #{tpu_custom_call.1} parent=1 // loop_footer
      %s24 = sadd.s32 1, %s20
    $region7: #{tpu_custom_call.1} parent=1 // loop_footer_branch
      %19 = sbr.rel target = $region3
    $region8: #{tpu_custom_call.1} parent=1 // loop_exit
      _
    %442 = vsyncpa [#allocation3], 1
    %s443 = scalar_lea.sflag [#allocation3], 1
    %444 = vsyncpa %s443, 1
    %445 = vsyncpa [#allocation6], 1
    %s446 = scalar_lea.sflag [#allocation6], 1
    %447 = vsyncpa %s446, 1
    %448 = vsyncpa [#allocation4], 1
    %s449 = scalar_lea.sflag [#allocation4], 1
    %450 = vsyncpa %s449, 1

</llo_original>
